<compile_context>
chip_gen: v5e
topology: v5e:2x2
jax: 0.10.0
libtpu: 0.0.40
codegen_flags: <defaults>
</compile_context>

<pallas_src>
import math

import jax
import jax.numpy as jnp
from jax.experimental import pallas as pl
from jax.experimental.pallas import tpu as pltpu

# ---------------- problem sizes (small, consistent with the module) -------------
BATCH = 8          # x.shape[0]
DIM = 8            # flow dimensionality (must be even)
HALF = DIM // 2
HIDDEN = 32        # hidden width of the s / t MLPs
NUM_LAYERS = 4     # number of coupling layers
NEG_SLOPE = 0.01   # torch.nn.LeakyReLU default


# ---------------------------------- kernel --------------------------------------
def realnvp_kernel(x_ref, w1_ref, b1_ref, w2_ref, b2_ref, out_ref):
    x = x_ref[...].astype(jnp.float32)          # (Bt, D)
    p = x[:, :HALF]                             # stored "xa" half (maybe reversed)
    q = x[:, HALF:]                             # stored "xb" half (maybe reversed)
    log_det = jnp.zeros((x.shape[0], 1), jnp.float32)

    for i in range(NUM_LAYERS):                 # static unroll (small L)
        # fused s/t first layer:  (Bt, HALF) @ (HALF, 2*HIDDEN)
        h = jnp.dot(p, w1_ref[i], preferred_element_type=jnp.float32) + b1_ref[i]
        h = jnp.where(h > 0, h, NEG_SLOPE * h)  # LeakyReLU (shared slope)

        # fused block-diagonal second layer: (Bt, 2*HIDDEN) @ (2*HIDDEN, 2*HALF)
        o = jnp.dot(h, w2_ref[i], preferred_element_type=jnp.float32) + b2_ref[i]
        s = jnp.tanh(o[:, :HALF])               # alpha == 1 (rezero_trick=False)
        t = o[:, HALF:]                         # beta folded into weights on host

        # forward coupling on the (possibly reversed) stored halves — exact, because
        # s, t were produced already in the same (reversed) element order.
        yb = (q - t) * jnp.exp(-s)
        log_det = log_det - jnp.sum(s, axis=1, keepdims=True)

        # next layer: xa <- flip(yb), xb <- flip(xa); flip is absorbed into weights,
        # so physically we just rotate the roles of the halves.
        p, q = yb, p

    # MultivariateNormal(0, I).log_prob(z); ||z||^2 is permutation invariant so the
    # final flip / reassembly is unnecessary.
    log_prob = (-0.5 * (jnp.sum(p * p, axis=1, keepdims=True)
                        + jnp.sum(q * q, axis=1, keepdims=True))
                - 0.5 * DIM * math.log(2.0 * math.pi))
    out_ref[...] = log_prob + log_det


# ----------------------------- host-side weight packing ---------------------------
def pack_params(params):
    """Fold flip / beta into the weights and fuse the s/t nets per layer."""
    (alpha, beta,
     s_w1, s_b1, s_w2, s_b2,
     t_w1, t_b1, t_w2, t_b2) = params
    del alpha  # == 1 with rezero_trick=False (alpha*tanh(x) != tanh(alpha*x) otherwise)

    w1_l, b1_l, w2_l, b2_l = [], [], [], []
    for i in range(NUM_LAYERS):
        sw1, sb1, sw2, sb2 = s_w1[i], s_b1[i], s_w2[i], s_b2[i]
        tw1, tb1 = t_w1[i], t_b1[i]
        tw2, tb2 = beta[i] * t_w2[i], beta[i] * t_b2[i]   # exact (t-net has no tanh)

        if i % 2 == 1:
            # absorb the flip of the previous layer:
            #   logical xa = reverse(stored half)  -> reverse W1 rows
            #   s, t must come out reversed        -> reverse W2 cols and b2
            sw1, tw1 = sw1[::-1, :], tw1[::-1, :]
            sw2, tw2 = sw2[:, ::-1], tw2[:, ::-1]
            sb2, tb2 = sb2[:, ::-1], tb2[:, ::-1]

        w1_l.append(jnp.concatenate([sw1, tw1], axis=1))          # (HALF, 2*HIDDEN)
        b1_l.append(jnp.concatenate([sb1, tb1], axis=1))          # (1, 2*HIDDEN)
        w2 = jnp.zeros((2 * HIDDEN, 2 * HALF), jnp.float32)
        w2 = w2.at[:HIDDEN, :HALF].set(sw2).at[HIDDEN:, HALF:].set(tw2)
        w2_l.append(w2)                                           # (2*HIDDEN, 2*HALF)
        b2_l.append(jnp.concatenate([sb2, tb2], axis=1))          # (1, 2*HALF)

    return (jnp.stack(w1_l), jnp.stack(b1_l), jnp.stack(w2_l), jnp.stack(b2_l))


# --------------------------------- wrapper ---------------------------------------
def realnvp_forward(x, params, *, block_b=512):
    w1, b1, w2, b2 = pack_params(params)
    B, D = x.shape

    bb = min(block_b, B)
    bb = max(8, (bb // 8) * 8)                 # sublane-aligned batch tile
    Bp = ((B + bb - 1) // bb) * bb
    xp = x if Bp == B else jnp.pad(x, ((0, Bp - B), (0, 0)))

    out = pl.pallas_call(
        realnvp_kernel,
        out_shape=jax.ShapeDtypeStruct((Bp, 1), jnp.float32),
        grid=(Bp // bb,),
        in_specs=[
            pl.BlockSpec((bb, D), lambda i: (i, 0)),
            pl.BlockSpec(w1.shape, lambda i: (0, 0, 0)),   # weights resident across tiles
            pl.BlockSpec(b1.shape, lambda i: (0, 0, 0)),
            pl.BlockSpec(w2.shape, lambda i: (0, 0, 0)),
            pl.BlockSpec(b2.shape, lambda i: (0, 0, 0)),
        ],
        out_specs=pl.BlockSpec((bb, 1), lambda i: (i, 0)),
        compiler_params=pltpu.CompilerParams(
            dimension_semantics=("parallel",)),
    )(xp, w1, b1, w2, b2)
    return out[:B, 0]                          # (B,)


# ----------------------------- pure-JAX reference --------------------------------
def realnvp_reference(x, params):
    (alpha, beta,
     s_w1, s_b1, s_w2, s_b2,
     t_w1, t_b1, t_w2, t_b2) = params
    z = x.astype(jnp.float32)
    B, D = z.shape
    half = D // 2
    log_det = jnp.zeros((B,), jnp.float32)

    def leaky_relu(v):
        return jnp.where(v > 0, v, NEG_SLOPE * v)

    for i in range(NUM_LAYERS):
        xa, xb = z[:, :half], z[:, half:]
        h = leaky_relu(xa @ s_w1[i] + s_b1[i])
        s = alpha[i] * jnp.tanh(h @ s_w2[i] + s_b2[i])
        g = leaky_relu(xa @ t_w1[i] + t_b1[i])
        t = beta[i] * (g @ t_w2[i] + t_b2[i])
        yb = (xb - t) * jnp.exp(-s)
        z = jnp.flip(jnp.concatenate([xa, yb], axis=1), axis=1)
        log_det = log_det - jnp.sum(s, axis=1)

    log_prob = -0.5 * jnp.sum(z * z, axis=1) - 0.5 * D * math.log(2.0 * math.pi)
    return log_prob + log_det


# ----------------------------------- main -----------------------------------------
def make_params(key):
    ks = jax.random.split(key, 8)
    scale = 0.2
    s_w1 = scale * jax.random.normal(ks[0], (NUM_LAYERS, HALF, HIDDEN), jnp.float32)
    s_b1 = scale * jax.random.normal(ks[1], (NUM_LAYERS, 1, HIDDEN), jnp.float32)
    s_w2 = scale * jax.random.normal(ks[2], (NUM_LAYERS, HIDDEN, HALF), jnp.float32)
    s_b2 = scale * jax.random.normal(ks[3], (NUM_LAYERS, 1, HALF), jnp.float32)
    t_w1 = scale * jax.random.normal(ks[4], (NUM_LAYERS, HALF, HIDDEN), jnp.float32)
    t_b1 = scale * jax.random.normal(ks[5], (NUM_LAYERS, 1, HIDDEN), jnp.float32)
    t_w2 = scale * jax.random.normal(ks[6], (NUM_LAYERS, HIDDEN, HALF), jnp.float32)
    t_b2 = scale * jax.random.normal(ks[7], (NUM_LAYERS, 1, HALF), jnp.float32)
    # rezero_trick=False  ->  alpha = beta = ones (buffers, not learned)
    alpha = jnp.ones((NUM_LAYERS,), jnp.float32)
    beta = jnp.ones((NUM_LAYERS,), jnp.float32)
    return (alpha, beta, s_w1, s_b1, s_w2, s_b2, t_w1, t_b1, t_w2, t_b2)


if __name__ == "__main__":
    key = jax.random.PRNGKey(0)
    kx, kp = jax.random.split(key)
    x = jax.random.normal(kx, (BATCH, DIM), jnp.float32)
    params = make_params(kp)

    out = realnvp_forward(x, params)
    out = jax.block_until_ready(out)

    ref = realnvp_reference(x, params)
    assert out.shape == (BATCH,)
    assert jnp.allclose(out, ref, rtol=1e-5, atol=1e-4), (out, ref)

    # TODO(synk): sample()/f_inv() (drawing from the prior) is not part of forward()
    # and is left unimplemented in the kernel.
    print("KERNEL_OK")
</pallas_src>

<mosaic_0001>
module attributes {stable_mosaic.version = 11 : i64} {
  func.func @realnvp_kernel(%arg0: i32, %arg1: memref<8x8xf32, #tpu.memory_space<vmem>>, %arg2: memref<4x4x64xf32, #tpu.memory_space<vmem>>, %arg3: memref<4x1x64xf32, #tpu.memory_space<vmem>>, %arg4: memref<4x64x8xf32, #tpu.memory_space<vmem>>, %arg5: memref<4x1x8xf32, #tpu.memory_space<vmem>>, %arg6: memref<8x1xf32, #tpu.memory_space<vmem>>) attributes {dimension_semantics = [#tpu.dimension_semantics<parallel>], iteration_bounds = array<i64: 1>, scalar_prefetch = 0 : i64, scratch_operands = 0 : i64, tpu.core_type = #tpu.core_type<tc>, window_params = [{transform_indices = @transform_0, window_bounds = array<i64: 8, 8>}, {pipeline_mode = #tpu.pipeline_mode<synchronous>, transform_indices = @transform_1, window_bounds = array<i64: 4, 4, 64>}, {pipeline_mode = #tpu.pipeline_mode<synchronous>, transform_indices = @transform_2, window_bounds = array<i64: 4, 1, 64>}, {pipeline_mode = #tpu.pipeline_mode<synchronous>, transform_indices = @transform_3, window_bounds = array<i64: 4, 64, 8>}, {pipeline_mode = #tpu.pipeline_mode<synchronous>, transform_indices = @transform_4, window_bounds = array<i64: 4, 1, 8>}, {transform_indices = @transform_5, window_bounds = array<i64: 8, 1>}]} {
    %c0 = arith.constant 0 : index
    %c0_0 = arith.constant 0 : index
    %0 = vector.load %arg1[%c0, %c0_0] : memref<8x8xf32, #tpu.memory_space<vmem>>, vector<8x8xf32>
    %1 = vector.extract_strided_slice %0 {offsets = [0, 0], sizes = [8, 4], strides = [1, 1]} : vector<8x8xf32> to vector<8x4xf32>
    %2 = vector.extract_strided_slice %0 {offsets = [0, 4], sizes = [8, 4], strides = [1, 1]} : vector<8x8xf32> to vector<8x4xf32>
    %cst = arith.constant 0.000000e+00 : f32
    %3 = vector.broadcast %cst : f32 to vector<8x1xf32>
    %c0_1 = arith.constant 0 : index
    %c0_2 = arith.constant 0 : index
    %c0_3 = arith.constant 0 : index
    %4 = vector.load %arg2[%c0_1, %c0_2, %c0_3] : memref<4x4x64xf32, #tpu.memory_space<vmem>>, vector<1x4x64xf32>
    %5 = vector.shape_cast %4 : vector<1x4x64xf32> to vector<4x64xf32>
    %cst_4 = arith.constant dense<0.000000e+00> : vector<8x64xf32>
    %6 = tpu.matmul %1, %5, %cst_4 {dimension_numbers = #tpu.dot_dimension_numbers<[1], [0], [0], [1], [0, 0, 1, 1], [], []>} : vector<8x4xf32>, vector<4x64xf32>, vector<8x64xf32> -> vector<8x64xf32>
    %c0_5 = arith.constant 0 : index
    %c0_6 = arith.constant 0 : index
    %c0_7 = arith.constant 0 : index
    %7 = vector.load %arg3[%c0_5, %c0_6, %c0_7] : memref<4x1x64xf32, #tpu.memory_space<vmem>>, vector<1x1x64xf32>
    %8 = vector.shape_cast %7 : vector<1x1x64xf32> to vector<1x64xf32>
    %9 = vector.broadcast %8 : vector<1x64xf32> to vector<8x64xf32>
    %10 = arith.addf %6, %9 : vector<8x64xf32>
    %cst_8 = arith.constant 0.000000e+00 : f32
    %11 = vector.broadcast %cst_8 : f32 to vector<8x64xf32>
    %12 = arith.cmpf ogt, %10, %11 : vector<8x64xf32>
    %cst_9 = arith.constant 0.00999999977 : f32
    %13 = vector.broadcast %cst_9 : f32 to vector<8x64xf32>
    %14 = arith.mulf %13, %10 : vector<8x64xf32>
    %15 = arith.select %12, %10, %14 : vector<8x64xi1>, vector<8x64xf32>
    %c0_10 = arith.constant 0 : index
    %c0_11 = arith.constant 0 : index
    %c0_12 = arith.constant 0 : index
    %16 = vector.load %arg4[%c0_10, %c0_11, %c0_12] : memref<4x64x8xf32, #tpu.memory_space<vmem>>, vector<1x64x8xf32>
    %17 = vector.shape_cast %16 : vector<1x64x8xf32> to vector<64x8xf32>
    %cst_13 = arith.constant dense<0.000000e+00> : vector<8x8xf32>
    %18 = tpu.matmul %15, %17, %cst_13 {dimension_numbers = #tpu.dot_dimension_numbers<[1], [0], [0], [1], [0, 0, 1, 1], [], []>} : vector<8x64xf32>, vector<64x8xf32>, vector<8x8xf32> -> vector<8x8xf32>
    %c0_14 = arith.constant 0 : index
    %c0_15 = arith.constant 0 : index
    %c0_16 = arith.constant 0 : index
    %19 = vector.load %arg5[%c0_14, %c0_15, %c0_16] : memref<4x1x8xf32, #tpu.memory_space<vmem>>, vector<1x1x8xf32>
    %20 = vector.shape_cast %19 : vector<1x1x8xf32> to vector<1x8xf32>
    %21 = vector.broadcast %20 : vector<1x8xf32> to vector<8x8xf32>
    %22 = arith.addf %18, %21 : vector<8x8xf32>
    %23 = vector.extract_strided_slice %22 {offsets = [0, 0], sizes = [8, 4], strides = [1, 1]} : vector<8x8xf32> to vector<8x4xf32>
    %24 = math.tanh %23 : vector<8x4xf32>
    %25 = vector.extract_strided_slice %22 {offsets = [0, 4], sizes = [8, 4], strides = [1, 1]} : vector<8x8xf32> to vector<8x4xf32>
    %26 = arith.subf %2, %25 : vector<8x4xf32>
    %cst_17 = arith.constant 0.000000e+00 : f32
    %27 = vector.broadcast %cst_17 : f32 to vector<8x4xf32>
    %28 = arith.subf %27, %24 : vector<8x4xf32>
    %29 = math.exp %28 : vector<8x4xf32>
    %30 = arith.mulf %26, %29 : vector<8x4xf32>
    %cst_18 = arith.constant dense<0.000000e+00> : vector<8xf32>
    %31 = vector.multi_reduction <add>, %24, %cst_18 [1] : vector<8x4xf32> to vector<8xf32>
    %32 = vector.shape_cast %31 : vector<8xf32> to vector<8x1xf32>
    %33 = arith.subf %3, %32 : vector<8x1xf32>
    %c1 = arith.constant 1 : index
    %c0_19 = arith.constant 0 : index
    %c0_20 = arith.constant 0 : index
    %34 = vector.load %arg2[%c1, %c0_19, %c0_20] : memref<4x4x64xf32, #tpu.memory_space<vmem>>, vector<1x4x64xf32>
    %35 = vector.shape_cast %34 : vector<1x4x64xf32> to vector<4x64xf32>
    %cst_21 = arith.constant dense<0.000000e+00> : vector<8x64xf32>
    %36 = tpu.matmul %30, %35, %cst_21 {dimension_numbers = #tpu.dot_dimension_numbers<[1], [0], [0], [1], [0, 0, 1, 1], [], []>} : vector<8x4xf32>, vector<4x64xf32>, vector<8x64xf32> -> vector<8x64xf32>
    %c1_22 = arith.constant 1 : index
    %c0_23 = arith.constant 0 : index
    %c0_24 = arith.constant 0 : index
    %37 = vector.load %arg3[%c1_22, %c0_23, %c0_24] : memref<4x1x64xf32, #tpu.memory_space<vmem>>, vector<1x1x64xf32>
    %38 = vector.shape_cast %37 : vector<1x1x64xf32> to vector<1x64xf32>
    %39 = vector.broadcast %38 : vector<1x64xf32> to vector<8x64xf32>
    %40 = arith.addf %36, %39 : vector<8x64xf32>
    %cst_25 = arith.constant 0.000000e+00 : f32
    %41 = vector.broadcast %cst_25 : f32 to vector<8x64xf32>
    %42 = arith.cmpf ogt, %40, %41 : vector<8x64xf32>
    %cst_26 = arith.constant 0.00999999977 : f32
    %43 = vector.broadcast %cst_26 : f32 to vector<8x64xf32>
    %44 = arith.mulf %43, %40 : vector<8x64xf32>
    %45 = arith.select %42, %40, %44 : vector<8x64xi1>, vector<8x64xf32>
    %c1_27 = arith.constant 1 : index
    %c0_28 = arith.constant 0 : index
    %c0_29 = arith.constant 0 : index
    %46 = vector.load %arg4[%c1_27, %c0_28, %c0_29] : memref<4x64x8xf32, #tpu.memory_space<vmem>>, vector<1x64x8xf32>
    %47 = vector.shape_cast %46 : vector<1x64x8xf32> to vector<64x8xf32>
    %cst_30 = arith.constant dense<0.000000e+00> : vector<8x8xf32>
    %48 = tpu.matmul %45, %47, %cst_30 {dimension_numbers = #tpu.dot_dimension_numbers<[1], [0], [0], [1], [0, 0, 1, 1], [], []>} : vector<8x64xf32>, vector<64x8xf32>, vector<8x8xf32> -> vector<8x8xf32>
    %c1_31 = arith.constant 1 : index
    %c0_32 = arith.constant 0 : index
    %c0_33 = arith.constant 0 : index
    %49 = vector.load %arg5[%c1_31, %c0_32, %c0_33] : memref<4x1x8xf32, #tpu.memory_space<vmem>>, vector<1x1x8xf32>
    %50 = vector.shape_cast %49 : vector<1x1x8xf32> to vector<1x8xf32>
    %51 = vector.broadcast %50 : vector<1x8xf32> to vector<8x8xf32>
    %52 = arith.addf %48, %51 : vector<8x8xf32>
    %53 = vector.extract_strided_slice %52 {offsets = [0, 0], sizes = [8, 4], strides = [1, 1]} : vector<8x8xf32> to vector<8x4xf32>
    %54 = math.tanh %53 : vector<8x4xf32>
    %55 = vector.extract_strided_slice %52 {offsets = [0, 4], sizes = [8, 4], strides = [1, 1]} : vector<8x8xf32> to vector<8x4xf32>
    %56 = arith.subf %1, %55 : vector<8x4xf32>
    %cst_34 = arith.constant 0.000000e+00 : f32
    %57 = vector.broadcast %cst_34 : f32 to vector<8x4xf32>
    %58 = arith.subf %57, %54 : vector<8x4xf32>
    %59 = math.exp %58 : vector<8x4xf32>
    %60 = arith.mulf %56, %59 : vector<8x4xf32>
    %cst_35 = arith.constant dense<0.000000e+00> : vector<8xf32>
    %61 = vector.multi_reduction <add>, %54, %cst_35 [1] : vector<8x4xf32> to vector<8xf32>
    %62 = vector.shape_cast %61 : vector<8xf32> to vector<8x1xf32>
    %63 = arith.subf %33, %62 : vector<8x1xf32>
    %c2 = arith.constant 2 : index
    %c0_36 = arith.constant 0 : index
    %c0_37 = arith.constant 0 : index
    %64 = vector.load %arg2[%c2, %c0_36, %c0_37] : memref<4x4x64xf32, #tpu.memory_space<vmem>>, vector<1x4x64xf32>
    %65 = vector.shape_cast %64 : vector<1x4x64xf32> to vector<4x64xf32>
    %cst_38 = arith.constant dense<0.000000e+00> : vector<8x64xf32>
    %66 = tpu.matmul %60, %65, %cst_38 {dimension_numbers = #tpu.dot_dimension_numbers<[1], [0], [0], [1], [0, 0, 1, 1], [], []>} : vector<8x4xf32>, vector<4x64xf32>, vector<8x64xf32> -> vector<8x64xf32>
    %c2_39 = arith.constant 2 : index
    %c0_40 = arith.constant 0 : index
    %c0_41 = arith.constant 0 : index
    %67 = vector.load %arg3[%c2_39, %c0_40, %c0_41] : memref<4x1x64xf32, #tpu.memory_space<vmem>>, vector<1x1x64xf32>
    %68 = vector.shape_cast %67 : vector<1x1x64xf32> to vector<1x64xf32>
    %69 = vector.broadcast %68 : vector<1x64xf32> to vector<8x64xf32>
    %70 = arith.addf %66, %69 : vector<8x64xf32>
    %cst_42 = arith.constant 0.000000e+00 : f32
    %71 = vector.broadcast %cst_42 : f32 to vector<8x64xf32>
    %72 = arith.cmpf ogt, %70, %71 : vector<8x64xf32>
    %cst_43 = arith.constant 0.00999999977 : f32
    %73 = vector.broadcast %cst_43 : f32 to vector<8x64xf32>
    %74 = arith.mulf %73, %70 : vector<8x64xf32>
    %75 = arith.select %72, %70, %74 : vector<8x64xi1>, vector<8x64xf32>
    %c2_44 = arith.constant 2 : index
    %c0_45 = arith.constant 0 : index
    %c0_46 = arith.constant 0 : index
    %76 = vector.load %arg4[%c2_44, %c0_45, %c0_46] : memref<4x64x8xf32, #tpu.memory_space<vmem>>, vector<1x64x8xf32>
    %77 = vector.shape_cast %76 : vector<1x64x8xf32> to vector<64x8xf32>
    %cst_47 = arith.constant dense<0.000000e+00> : vector<8x8xf32>
    %78 = tpu.matmul %75, %77, %cst_47 {dimension_numbers = #tpu.dot_dimension_numbers<[1], [0], [0], [1], [0, 0, 1, 1], [], []>} : vector<8x64xf32>, vector<64x8xf32>, vector<8x8xf32> -> vector<8x8xf32>
    %c2_48 = arith.constant 2 : index
    %c0_49 = arith.constant 0 : index
    %c0_50 = arith.constant 0 : index
    %79 = vector.load %arg5[%c2_48, %c0_49, %c0_50] : memref<4x1x8xf32, #tpu.memory_space<vmem>>, vector<1x1x8xf32>
    %80 = vector.shape_cast %79 : vector<1x1x8xf32> to vector<1x8xf32>
    %81 = vector.broadcast %80 : vector<1x8xf32> to vector<8x8xf32>
    %82 = arith.addf %78, %81 : vector<8x8xf32>
    %83 = vector.extract_strided_slice %82 {offsets = [0, 0], sizes = [8, 4], strides = [1, 1]} : vector<8x8xf32> to vector<8x4xf32>
    %84 = math.tanh %83 : vector<8x4xf32>
    %85 = vector.extract_strided_slice %82 {offsets = [0, 4], sizes = [8, 4], strides = [1, 1]} : vector<8x8xf32> to vector<8x4xf32>
    %86 = arith.subf %30, %85 : vector<8x4xf32>
    %cst_51 = arith.constant 0.000000e+00 : f32
    %87 = vector.broadcast %cst_51 : f32 to vector<8x4xf32>
    %88 = arith.subf %87, %84 : vector<8x4xf32>
    %89 = math.exp %88 : vector<8x4xf32>
    %90 = arith.mulf %86, %89 : vector<8x4xf32>
    %cst_52 = arith.constant dense<0.000000e+00> : vector<8xf32>
    %91 = vector.multi_reduction <add>, %84, %cst_52 [1] : vector<8x4xf32> to vector<8xf32>
    %92 = vector.shape_cast %91 : vector<8xf32> to vector<8x1xf32>
    %93 = arith.subf %63, %92 : vector<8x1xf32>
    %c3 = arith.constant 3 : index
    %c0_53 = arith.constant 0 : index
    %c0_54 = arith.constant 0 : index
    %94 = vector.load %arg2[%c3, %c0_53, %c0_54] : memref<4x4x64xf32, #tpu.memory_space<vmem>>, vector<1x4x64xf32>
    %95 = vector.shape_cast %94 : vector<1x4x64xf32> to vector<4x64xf32>
    %cst_55 = arith.constant dense<0.000000e+00> : vector<8x64xf32>
    %96 = tpu.matmul %90, %95, %cst_55 {dimension_numbers = #tpu.dot_dimension_numbers<[1], [0], [0], [1], [0, 0, 1, 1], [], []>} : vector<8x4xf32>, vector<4x64xf32>, vector<8x64xf32> -> vector<8x64xf32>
    %c3_56 = arith.constant 3 : index
    %c0_57 = arith.constant 0 : index
    %c0_58 = arith.constant 0 : index
    %97 = vector.load %arg3[%c3_56, %c0_57, %c0_58] : memref<4x1x64xf32, #tpu.memory_space<vmem>>, vector<1x1x64xf32>
    %98 = vector.shape_cast %97 : vector<1x1x64xf32> to vector<1x64xf32>
    %99 = vector.broadcast %98 : vector<1x64xf32> to vector<8x64xf32>
    %100 = arith.addf %96, %99 : vector<8x64xf32>
    %cst_59 = arith.constant 0.000000e+00 : f32
    %101 = vector.broadcast %cst_59 : f32 to vector<8x64xf32>
    %102 = arith.cmpf ogt, %100, %101 : vector<8x64xf32>
    %cst_60 = arith.constant 0.00999999977 : f32
    %103 = vector.broadcast %cst_60 : f32 to vector<8x64xf32>
    %104 = arith.mulf %103, %100 : vector<8x64xf32>
    %105 = arith.select %102, %100, %104 : vector<8x64xi1>, vector<8x64xf32>
    %c3_61 = arith.constant 3 : index
    %c0_62 = arith.constant 0 : index
    %c0_63 = arith.constant 0 : index
    %106 = vector.load %arg4[%c3_61, %c0_62, %c0_63] : memref<4x64x8xf32, #tpu.memory_space<vmem>>, vector<1x64x8xf32>
    %107 = vector.shape_cast %106 : vector<1x64x8xf32> to vector<64x8xf32>
    %cst_64 = arith.constant dense<0.000000e+00> : vector<8x8xf32>
    %108 = tpu.matmul %105, %107, %cst_64 {dimension_numbers = #tpu.dot_dimension_numbers<[1], [0], [0], [1], [0, 0, 1, 1], [], []>} : vector<8x64xf32>, vector<64x8xf32>, vector<8x8xf32> -> vector<8x8xf32>
    %c3_65 = arith.constant 3 : index
    %c0_66 = arith.constant 0 : index
    %c0_67 = arith.constant 0 : index
    %109 = vector.load %arg5[%c3_65, %c0_66, %c0_67] : memref<4x1x8xf32, #tpu.memory_space<vmem>>, vector<1x1x8xf32>
    %110 = vector.shape_cast %109 : vector<1x1x8xf32> to vector<1x8xf32>
    %111 = vector.broadcast %110 : vector<1x8xf32> to vector<8x8xf32>
    %112 = arith.addf %108, %111 : vector<8x8xf32>
    %113 = vector.extract_strided_slice %112 {offsets = [0, 0], sizes = [8, 4], strides = [1, 1]} : vector<8x8xf32> to vector<8x4xf32>
    %114 = math.tanh %113 : vector<8x4xf32>
    %115 = vector.extract_strided_slice %112 {offsets = [0, 4], sizes = [8, 4], strides = [1, 1]} : vector<8x8xf32> to vector<8x4xf32>
    %116 = arith.subf %60, %115 : vector<8x4xf32>
    %cst_68 = arith.constant 0.000000e+00 : f32
    %117 = vector.broadcast %cst_68 : f32 to vector<8x4xf32>
    %118 = arith.subf %117, %114 : vector<8x4xf32>
    %119 = math.exp %118 : vector<8x4xf32>
    %120 = arith.mulf %116, %119 : vector<8x4xf32>
    %cst_69 = arith.constant dense<0.000000e+00> : vector<8xf32>
    %121 = vector.multi_reduction <add>, %114, %cst_69 [1] : vector<8x4xf32> to vector<8xf32>
    %122 = vector.shape_cast %121 : vector<8xf32> to vector<8x1xf32>
    %123 = arith.subf %93, %122 : vector<8x1xf32>
    %124 = arith.mulf %120, %120 : vector<8x4xf32>
    %cst_70 = arith.constant dense<0.000000e+00> : vector<8xf32>
    %125 = vector.multi_reduction <add>, %124, %cst_70 [1] : vector<8x4xf32> to vector<8xf32>
    %126 = vector.shape_cast %125 : vector<8xf32> to vector<8x1xf32>
    %127 = arith.mulf %90, %90 : vector<8x4xf32>
    %cst_71 = arith.constant dense<0.000000e+00> : vector<8xf32>
    %128 = vector.multi_reduction <add>, %127, %cst_71 [1] : vector<8x4xf32> to vector<8xf32>
    %129 = vector.shape_cast %128 : vector<8xf32> to vector<8x1xf32>
    %130 = arith.addf %126, %129 : vector<8x1xf32>
    %cst_72 = arith.constant -5.000000e-01 : f32
    %131 = vector.broadcast %cst_72 : f32 to vector<8x1xf32>
    %132 = arith.mulf %131, %130 : vector<8x1xf32>
    %cst_73 = arith.constant 7.35150814 : f32
    %133 = vector.broadcast %cst_73 : f32 to vector<8x1xf32>
    %134 = arith.subf %132, %133 : vector<8x1xf32>
    %135 = arith.addf %134, %123 : vector<8x1xf32>
    %c0_74 = arith.constant 0 : index
    %c0_75 = arith.constant 0 : index
    %136 = vector.load %arg6[%c0_74, %c0_75] : memref<8x1xf32, #tpu.memory_space<vmem>>, vector<8x1xf32>
    tpu.vector_store %arg6[%c0_74, %c0_75], %135 {strides = array<i32>} : memref<8x1xf32, #tpu.memory_space<vmem>>, vector<8x1xf32>,
    return
  }
  func.func @transform_0(%arg0: i32) -> (i32, i32) {
    %c0_i32 = arith.constant 0 : i32
    %c0_i32_0 = arith.constant 0 : i32
    return %arg0, %c0_i32 : i32, i32
  }
  func.func @transform_1(%arg0: i32) -> (i32, i32, i32) {
    %c0_i32 = arith.constant 0 : i32
    %c0_i32_0 = arith.constant 0 : i32
    %c0_i32_1 = arith.constant 0 : i32
    %c0_i32_2 = arith.constant 0 : i32
    return %c0_i32, %c0_i32_0, %c0_i32_1 : i32, i32, i32
  }
  func.func @transform_2(%arg0: i32) -> (i32, i32, i32) {
    %c0_i32 = arith.constant 0 : i32
    %c0_i32_0 = arith.constant 0 : i32
    %c0_i32_1 = arith.constant 0 : i32
    %c0_i32_2 = arith.constant 0 : i32
    return %c0_i32, %c0_i32_0, %c0_i32_1 : i32, i32, i32
  }
  func.func @transform_3(%arg0: i32) -> (i32, i32, i32) {
    %c0_i32 = arith.constant 0 : i32
    %c0_i32_0 = arith.constant 0 : i32
    %c0_i32_1 = arith.constant 0 : i32
    %c0_i32_2 = arith.constant 0 : i32
    return %c0_i32, %c0_i32_0, %c0_i32_1 : i32, i32, i32
  }
  func.func @transform_4(%arg0: i32) -> (i32, i32, i32) {
    %c0_i32 = arith.constant 0 : i32
    %c0_i32_0 = arith.constant 0 : i32
    %c0_i32_1 = arith.constant 0 : i32
    %c0_i32_2 = arith.constant 0 : i32
    return %c0_i32, %c0_i32_0, %c0_i32_1 : i32, i32, i32
  }
  func.func @transform_5(%arg0: i32) -> (i32, i32) {
    %c0_i32 = arith.constant 0 : i32
    %c0_i32_0 = arith.constant 0 : i32
    return %arg0, %c0_i32 : i32, i32
  }
}

</mosaic_0001>

<llo_original>
// kernel: tpu_custom_call.1
$region0: #{tpu_custom_call.1}
  #allocation0 [shape = 'u32[]', space=smem, size = 0x4, offset = 0x4, fixed_abs, tag = 'smem constant byte address 0x4 - core index']
  #allocation1 [shape = 'u32[72,128]{1,0:T(1,128)}', space=vmem, size = 0x9000, scoped, tag = 'internal scratch']
  %s0 = inlined_call_operand.vmem [shape: f32[8,8], index: 0, kind: input, shape index: {}]
  %s1 = inlined_call_operand.vmem [shape: f32[4,4,64], index: 1, kind: input, shape index: {}]
  %s2 = inlined_call_operand.vmem [shape: f32[4,1,64], index: 2, kind: input, shape index: {}]
  %s3 = inlined_call_operand.vmem [shape: f32[4,64,8], index: 3, kind: input, shape index: {}]
  %s4 = inlined_call_operand.vmem [shape: f32[4,1,8], index: 4, kind: input, shape index: {}]
  %s5 = inlined_call_operand.vmem [shape: f32[8,1], index: 5, kind: output, shape index: {}]
  %s6 = sld [smem:[#allocation0]]
  $region30: #{tpu_custom_call.1} parent=0
    _
  %s8 = ssub.s32 1, %s6
  %s9 = scalar_select 0, %s8, %s6
  // Predicated region
  $region2: #{tpu_custom_call.1} parent=0 // pred_check
    _
  $region3: #{tpu_custom_call.1} parent=0 // pred_check_branch
    %11 = sbr.rel (0) target = $region5
  $region4: #{tpu_custom_call.1} parent=0 // pred_region
    _
  $region5: #{tpu_custom_call.1} parent=0 // pred_fallthru
    _
  // Predicated region
  $region6: #{tpu_custom_call.1} parent=0 // pred_check
    _
  $region7: #{tpu_custom_call.1} parent=0 // pred_check_branch
    %13 = sbr.rel (0) target = $region9
  $region8: #{tpu_custom_call.1} parent=0 // pred_region
    _
  $region9: #{tpu_custom_call.1} parent=0 // pred_fallthru
    _
  // Predicated region
  $region10: #{tpu_custom_call.1} parent=0 // pred_check
    _
  $region11: #{tpu_custom_call.1} parent=0 // pred_check_branch
    %15 = sbr.rel (0) target = $region13
  $region12: #{tpu_custom_call.1} parent=0 // pred_region
    _
  $region13: #{tpu_custom_call.1} parent=0 // pred_fallthru
    _
  // Predicated region
  $region14: #{tpu_custom_call.1} parent=0 // pred_check
    _
  $region15: #{tpu_custom_call.1} parent=0 // pred_check_branch
    %17 = sbr.rel (0) target = $region17
  $region16: #{tpu_custom_call.1} parent=0 // pred_region
    _
  $region17: #{tpu_custom_call.1} parent=0 // pred_fallthru
    _
  // Predicated region
  $region18: #{tpu_custom_call.1} parent=0 // pred_check
    _
  $region19: #{tpu_custom_call.1} parent=0 // pred_check_branch
    %19 = sbr.rel (0) target = $region21
  $region20: #{tpu_custom_call.1} parent=0 // pred_region
    _
  $region21: #{tpu_custom_call.1} parent=0 // pred_fallthru
    _
  %v20 = vld [vmem:[%s0] sm:$0xff]
  %v21 = vld [vmem:[%s1] sm:$0xf]
  %v22 = vld [vmem:[%s2] sm:$0x1]
  %v24 = vperm.slane %v22, 0
  %vm26 = vcmask 31744
  %v28 = vsel %vm26, %v20, 0
  %vm30 = vcmask 1043456
  %v32 = vsel %vm30, %v21, 0
  %34 = vmatpush.msra.mxu0 0.0
  %35 = vmatpush.msra.mxu0 0.0
  %36 = vmatpush.msra.mxu0 0.0
  %37 = vmatpush.msra.mxu0 0.0
  %38 = vmatpush.msra.mxu0 0.0
  %39 = vmatpush.msra.mxu0 0.0
  %40 = vmatpush.msra.mxu0 0.0
  %41 = vmatpush.msra.mxu0 0.0
  %42 = vmatpush.msra.mxu0 0.0
  %43 = vmatpush.msra.mxu0 0.0
  %44 = vmatpush.msra.mxu0 0.0
  %45 = vmatpush.msra.mxu0 0.0
  %46 = vmatpush.msra.mxu0 0.0
  %47 = vmatpush.msra.mxu0 0.0
  %48 = vmatpush.msra.mxu0 0.0
  %49 = vmatpush.msra.mxu0 %v32
  %50 = vmatmul.f32.gmra.mxu0 %v28
  %v51 = vpop.f32.mrf.mxu0
  %v52 = vadd.f32 %v24, %v51
  %53 = vdwg.mxu0
  %vm54 = vcmp.gt.f32.partialorder %v52, 0.0
  %v55 = vmul.f32 %v52, 0.01
  %v56 = vsel %vm54, %v52, %v55
  %v57 = vld [vmem:[%s3] sm:$0xff]
  %v58 = vld [vmem:[%s3 + $0x8] sm:$0xff]
  %v59 = vld [vmem:[%s3 + $0x10] sm:$0xff]
  %v60 = vld [vmem:[%s3 + $0x18] sm:$0xff]
  %v61 = vld [vmem:[%s3 + $0x20] sm:$0xff]
  %v62 = vld [vmem:[%s3 + $0x28] sm:$0xff]
  %v63 = vld [vmem:[%s3 + $0x30] sm:$0xff]
  %v64 = vld [vmem:[%s3 + $0x38] sm:$0xff]
  %v65 = vld [vmem:[%s4] sm:$0x1]
  %v67 = vperm.slane %v65, 0
  %vm69 = vcmask 523264
  %v71 = vsel %vm69, %v56, 0
  %73 = vmatpush.msra.mxu0 0.0
  %74 = vmatpush.msra.mxu0 0.0
  %75 = vmatpush.msra.mxu0 0.0
  %76 = vmatpush.msra.mxu0 0.0
  %77 = vmatpush.msra.mxu0 0.0
  %78 = vmatpush.msra.mxu0 0.0
  %79 = vmatpush.msra.mxu0 0.0
  %80 = vmatpush.msra.mxu0 0.0
  %81 = vmatpush.msra.mxu0 %v64
  %82 = vmatpush.msra.mxu0 %v63
  %83 = vmatpush.msra.mxu0 %v62
  %84 = vmatpush.msra.mxu0 %v61
  %85 = vmatpush.msra.mxu0 %v60
  %86 = vmatpush.msra.mxu0 %v59
  %87 = vmatpush.msra.mxu0 %v58
  %88 = vmatpush.msra.mxu0 %v57
  %89 = vmatmul.f32.gmra.mxu0 %v71
  %v90 = vpop.f32.mrf.mxu0
  %v91 = vadd.f32 %v67, %v90
  %92 = vdwg.mxu0
  %v93 = vtanh.pop %v91
  %v94 = vsub.f32 %v20, %v91
  %v95 = vsub.f32 0.0, %v93
  %v96 = vmul.f32 %v95, 1.442695
  %v97 = vpow.pop %v96
  %99 = vrot.lane.b32.xlu0 %v97, 4
  %v100 = vpop.permute.xlu0 %99
  %v102 = vmul.f32 %v94, %v100
  %v103 = vsel %vm26, %v93, 0.0
  %104 = vadd.xlane.f32.xlu0 %v103
  %v105 = vpop.xlane.xlu0 %104
  %v106 = vsub.f32 0.0, %v105
  %s107 = scalar_lea.vmem %s1, 4
  %v108 = vld [vmem:[%s107] sm:$0xf]
  %s109 = scalar_lea.vmem %s2, 1
  %v110 = vld [vmem:[%s109] sm:$0x1]
  %v112 = vperm.slane %v110, 0
  %115 = vrot.lane.b32.xlu0 %v102, 124
  %v116 = vpop.permute.xlu0 %115
  %v117 = vsel %vm26, %v116, 0
  %v120 = vsel %vm30, %v108, 0
  %122 = vmatpush.msra.mxu0 0.0
  %123 = vmatpush.msra.mxu0 0.0
  %124 = vmatpush.msra.mxu0 0.0
  %125 = vmatpush.msra.mxu0 0.0
  %126 = vmatpush.msra.mxu0 0.0
  %127 = vmatpush.msra.mxu0 0.0
  %128 = vmatpush.msra.mxu0 0.0
  %129 = vmatpush.msra.mxu0 0.0
  %130 = vmatpush.msra.mxu0 0.0
  %131 = vmatpush.msra.mxu0 0.0
  %132 = vmatpush.msra.mxu0 0.0
  %133 = vmatpush.msra.mxu0 0.0
  %134 = vmatpush.msra.mxu0 0.0
  %135 = vmatpush.msra.mxu0 0.0
  %136 = vmatpush.msra.mxu0 0.0
  %137 = vmatpush.msra.mxu0 %v120
  %138 = vmatmul.f32.gmra.mxu0 %v117
  %v139 = vpop.f32.mrf.mxu0
  %v140 = vadd.f32 %v112, %v139
  %141 = vdwg.mxu0
  %vm142 = vcmp.gt.f32.partialorder %v140, 0.0
  %v143 = vmul.f32 %v140, 0.01
  %v144 = vsel %vm142, %v140, %v143
  %s145 = scalar_lea.vmem %s3, 64
  %v146 = vld [vmem:[%s145] sm:$0xff]
  %v147 = vld [vmem:[%s145 + $0x8] sm:$0xff]
  %v148 = vld [vmem:[%s145 + $0x10] sm:$0xff]
  %v149 = vld [vmem:[%s145 + $0x18] sm:$0xff]
  %v150 = vld [vmem:[%s145 + $0x20] sm:$0xff]
  %v151 = vld [vmem:[%s145 + $0x28] sm:$0xff]
  %v152 = vld [vmem:[%s145 + $0x30] sm:$0xff]
  %v153 = vld [vmem:[%s145 + $0x38] sm:$0xff]
  %s154 = scalar_lea.vmem %s4, 1
  %v155 = vld [vmem:[%s154] sm:$0x1]
  %v157 = vperm.slane %v155, 0
  %v160 = vsel %vm69, %v144, 0
  %162 = vmatpush.msra.mxu0 0.0
  %163 = vmatpush.msra.mxu0 0.0
  %164 = vmatpush.msra.mxu0 0.0
  %165 = vmatpush.msra.mxu0 0.0
  %166 = vmatpush.msra.mxu0 0.0
  %167 = vmatpush.msra.mxu0 0.0
  %168 = vmatpush.msra.mxu0 0.0
  %169 = vmatpush.msra.mxu0 0.0
  %170 = vmatpush.msra.mxu0 %v153
  %171 = vmatpush.msra.mxu0 %v152
  %172 = vmatpush.msra.mxu0 %v151
  %173 = vmatpush.msra.mxu0 %v150
  %174 = vmatpush.msra.mxu0 %v149
  %175 = vmatpush.msra.mxu0 %v148
  %176 = vmatpush.msra.mxu0 %v147
  %177 = vmatpush.msra.mxu0 %v146
  %178 = vmatmul.f32.gmra.mxu0 %v160
  %v179 = vpop.f32.mrf.mxu0
  %v180 = vadd.f32 %v157, %v179
  %181 = vdwg.mxu0
  %v182 = vtanh.pop %v180
  %184 = vrot.lane.b32.xlu0 %v180, 124
  %v185 = vpop.permute.xlu0 %184
  %v187 = vsub.f32 %v20, %v185
  %v188 = vsub.f32 0.0, %v182
  %v189 = vmul.f32 %v188, 1.442695
  %v190 = vpow.pop %v189
  %v191 = vmul.f32 %v187, %v190
  %v192 = vsel %vm26, %v182, 0.0
  %193 = vadd.xlane.f32.xlu0 %v192
  %v194 = vpop.xlane.xlu0 %193
  %v195 = vsub.f32 %v106, %v194
  %s196 = scalar_lea.vmem %s1, 8
  %v197 = vld [vmem:[%s196] sm:$0xf]
  %s198 = scalar_lea.vmem %s2, 2
  %v199 = vld [vmem:[%s198] sm:$0x1]
  %v201 = vperm.slane %v199, 0
  %v204 = vsel %vm26, %v191, 0
  %v207 = vsel %vm30, %v197, 0
  %209 = vmatpush.msra.mxu0 0.0
  %210 = vmatpush.msra.mxu0 0.0
  %211 = vmatpush.msra.mxu0 0.0
  %212 = vmatpush.msra.mxu0 0.0
  %213 = vmatpush.msra.mxu0 0.0
  %214 = vmatpush.msra.mxu0 0.0
  %215 = vmatpush.msra.mxu0 0.0
  %216 = vmatpush.msra.mxu0 0.0
  %217 = vmatpush.msra.mxu0 0.0
  %218 = vmatpush.msra.mxu0 0.0
  %219 = vmatpush.msra.mxu0 0.0
  %220 = vmatpush.msra.mxu0 0.0
  %221 = vmatpush.msra.mxu0 0.0
  %222 = vmatpush.msra.mxu0 0.0
  %223 = vmatpush.msra.mxu0 0.0
  %224 = vmatpush.msra.mxu0 %v207
  %225 = vmatmul.f32.gmra.mxu0 %v204
  %v226 = vpop.f32.mrf.mxu0
  %v227 = vadd.f32 %v201, %v226
  %228 = vdwg.mxu0
  %vm229 = vcmp.gt.f32.partialorder %v227, 0.0
  %v230 = vmul.f32 %v227, 0.01
  %v231 = vsel %vm229, %v227, %v230
  %s232 = scalar_lea.vmem %s3, 128
  %v233 = vld [vmem:[%s232] sm:$0xff]
  %v234 = vld [vmem:[%s232 + $0x8] sm:$0xff]
  %v235 = vld [vmem:[%s232 + $0x10] sm:$0xff]
  %v236 = vld [vmem:[%s232 + $0x18] sm:$0xff]
  %v237 = vld [vmem:[%s232 + $0x20] sm:$0xff]
  %v238 = vld [vmem:[%s232 + $0x28] sm:$0xff]
  %v239 = vld [vmem:[%s232 + $0x30] sm:$0xff]
  %v240 = vld [vmem:[%s232 + $0x38] sm:$0xff]
  %s241 = scalar_lea.vmem %s4, 2
  %v242 = vld [vmem:[%s241] sm:$0x1]
  %v244 = vperm.slane %v242, 0
  %v247 = vsel %vm69, %v231, 0
  %249 = vmatpush.msra.mxu0 0.0
  %250 = vmatpush.msra.mxu0 0.0
  %251 = vmatpush.msra.mxu0 0.0
  %252 = vmatpush.msra.mxu0 0.0
  %253 = vmatpush.msra.mxu0 0.0
  %254 = vmatpush.msra.mxu0 0.0
  %255 = vmatpush.msra.mxu0 0.0
  %256 = vmatpush.msra.mxu0 0.0
  %257 = vmatpush.msra.mxu0 %v240
  %258 = vmatpush.msra.mxu0 %v239
  %259 = vmatpush.msra.mxu0 %v238
  %260 = vmatpush.msra.mxu0 %v237
  %261 = vmatpush.msra.mxu0 %v236
  %262 = vmatpush.msra.mxu0 %v235
  %263 = vmatpush.msra.mxu0 %v234
  %264 = vmatpush.msra.mxu0 %v233
  %265 = vmatmul.f32.gmra.mxu0 %v247
  %v266 = vpop.f32.mrf.mxu0
  %v267 = vadd.f32 %v244, %v266
  %268 = vdwg.mxu0
  %v269 = vtanh.pop %v267
  %v270 = vsub.f32 %v102, %v267
  %v271 = vsub.f32 0.0, %v269
  %v272 = vmul.f32 %v271, 1.442695
  %v273 = vpow.pop %v272
  %275 = vrot.lane.b32.xlu0 %v273, 4
  %v276 = vpop.permute.xlu0 %275
  %v278 = vmul.f32 %v270, %v276
  %v279 = vsel %vm26, %v269, 0.0
  %280 = vadd.xlane.f32.xlu0 %v279
  %v281 = vpop.xlane.xlu0 %280
  %v282 = vsub.f32 %v195, %v281
  %s283 = scalar_lea.vmem %s1, 12
  %v284 = vld [vmem:[%s283] sm:$0xf]
  %s285 = scalar_lea.vmem %s2, 3
  %v286 = vld [vmem:[%s285] sm:$0x1]
  %v288 = vperm.slane %v286, 0
  %291 = vrot.lane.b32.xlu0 %v278, 124
  %v292 = vpop.permute.xlu0 %291
  %v293 = vsel %vm26, %v292, 0
  %v296 = vsel %vm30, %v284, 0
  %298 = vmatpush.msra.mxu0 0.0
  %299 = vmatpush.msra.mxu0 0.0
  %300 = vmatpush.msra.mxu0 0.0
  %301 = vmatpush.msra.mxu0 0.0
  %302 = vmatpush.msra.mxu0 0.0
  %303 = vmatpush.msra.mxu0 0.0
  %304 = vmatpush.msra.mxu0 0.0
  %305 = vmatpush.msra.mxu0 0.0
  %306 = vmatpush.msra.mxu0 0.0
  %307 = vmatpush.msra.mxu0 0.0
  %308 = vmatpush.msra.mxu0 0.0
  %309 = vmatpush.msra.mxu0 0.0
  %310 = vmatpush.msra.mxu0 0.0
  %311 = vmatpush.msra.mxu0 0.0
  %312 = vmatpush.msra.mxu0 0.0
  %313 = vmatpush.msra.mxu0 %v296
  %314 = vmatmul.f32.gmra.mxu0 %v293
  %v315 = vpop.f32.mrf.mxu0
  %v316 = vadd.f32 %v288, %v315
  %317 = vdwg.mxu0
  %vm318 = vcmp.gt.f32.partialorder %v316, 0.0
  %v319 = vmul.f32 %v316, 0.01
  %v320 = vsel %vm318, %v316, %v319
  %s321 = scalar_lea.vmem %s3, 192
  %v322 = vld [vmem:[%s321] sm:$0xff]
  %v323 = vld [vmem:[%s321 + $0x8] sm:$0xff]
  %v324 = vld [vmem:[%s321 + $0x10] sm:$0xff]
  %v325 = vld [vmem:[%s321 + $0x18] sm:$0xff]
  %v326 = vld [vmem:[%s321 + $0x20] sm:$0xff]
  %v327 = vld [vmem:[%s321 + $0x28] sm:$0xff]
  %v328 = vld [vmem:[%s321 + $0x30] sm:$0xff]
  %v329 = vld [vmem:[%s321 + $0x38] sm:$0xff]
  %s330 = scalar_lea.vmem %s4, 3
  %v331 = vld [vmem:[%s330] sm:$0x1]
  %v333 = vperm.slane %v331, 0
  %v336 = vsel %vm69, %v320, 0
  %338 = vmatpush.msra.mxu0 0.0
  %339 = vmatpush.msra.mxu0 0.0
  %340 = vmatpush.msra.mxu0 0.0
  %341 = vmatpush.msra.mxu0 0.0
  %342 = vmatpush.msra.mxu0 0.0
  %343 = vmatpush.msra.mxu0 0.0
  %344 = vmatpush.msra.mxu0 0.0
  %345 = vmatpush.msra.mxu0 0.0
  %346 = vmatpush.msra.mxu0 %v329
  %347 = vmatpush.msra.mxu0 %v328
  %348 = vmatpush.msra.mxu0 %v327
  %349 = vmatpush.msra.mxu0 %v326
  %350 = vmatpush.msra.mxu0 %v325
  %351 = vmatpush.msra.mxu0 %v324
  %352 = vmatpush.msra.mxu0 %v323
  %353 = vmatpush.msra.mxu0 %v322
  %354 = vmatmul.f32.gmra.mxu0 %v336
  %v355 = vpop.f32.mrf.mxu0
  %v356 = vadd.f32 %v333, %v355
  %357 = vdwg.mxu0
  %v358 = vtanh.pop %v356
  %360 = vrot.lane.b32.xlu0 %v356, 124
  %v361 = vpop.permute.xlu0 %360
  %v363 = vsub.f32 %v191, %v361
  %v364 = vsub.f32 0.0, %v358
  %v365 = vmul.f32 %v364, 1.442695
  %v366 = vpow.pop %v365
  %v367 = vmul.f32 %v363, %v366
  %v368 = vsel %vm26, %v358, 0.0
  %369 = vadd.xlane.f32.xlu0 %v368
  %v370 = vpop.xlane.xlu0 %369
  %v371 = vsub.f32 %v282, %v370
  %v372 = vmul.f32 %v367, %v367
  %v373 = vsel %vm26, %v372, 0.0
  %374 = vadd.xlane.f32.xlu0 %v373
  %v375 = vpop.xlane.xlu0 %374
  %v376 = vmul.f32 %v278, %v278
  %378 = vrot.lane.b32.xlu0 %v376, 124
  %v379 = vpop.permute.xlu0 %378
  %v381 = vsel %vm26, %v379, 0.0
  %382 = vadd.xlane.f32.xlu0 %v381
  %v383 = vpop.xlane.xlu0 %382
  %v384 = vadd.f32 %v375, %v383
  %v385 = vmul.f32 %v384, -0.5
  %v386 = vsub.f32 %v385, 7.351508
  %v387 = vadd.f32 %v386, %v371
  %vm388 = vcmask 7168
  %389 = vst.msk [vmem:[%s5] sm:$0xff] %vm388, %v387
  // Predicated region
  $region22: #{tpu_custom_call.1} parent=0 // pred_check
    _
  $region23: #{tpu_custom_call.1} parent=0 // pred_check_branch
    %391 = sbr.rel (0) target = $region25
  $region24: #{tpu_custom_call.1} parent=0 // pred_region
    _
  $region25: #{tpu_custom_call.1} parent=0 // pred_fallthru
    _
  // Predicated region
  $region26: #{tpu_custom_call.1} parent=0 // pred_check
    _
  $region27: #{tpu_custom_call.1} parent=0 // pred_check_branch
    %393 = sbr.rel (0) target = $region29
  $region28: #{tpu_custom_call.1} parent=0 // pred_region
    _
  $region29: #{tpu_custom_call.1} parent=0 // pred_fallthru
    _

</llo_original>
